<compile_context>
chip_gen: v5e
topology: v5e:2x2
jax: 0.10.0
libtpu: 0.0.40
codegen_flags: <defaults>
</compile_context>

<pallas_src>
import jax
import jax.numpy as jnp
from jax.experimental import pallas as pl
from jax.experimental.pallas import tpu as pltpu

HIDDEN = 128


def v_mlp_kernel(x_ref, w1_ref, b1_ref, w2_ref, b2_ref, o_ref):
    # x arrives f32 straight from HBM (single pass); cast to bf16 on the VPU
    # here, hidden under the x-tile DMA, instead of a standalone XLA convert.
    x_bf16 = x_ref[...].astype(jnp.bfloat16)
    # Layer 1 on the MXU: bf16 x bf16 -> f32 accumulate.
    h = jnp.dot(x_bf16, w1_ref[...],
                preferred_element_type=jnp.float32)        # [TILE_B, 128] f32
    # Bias + ReLU on the VPU (f32).
    h = jnp.maximum(h + b1_ref[...], 0.0)
    # Layer 2 (out_features == 1): VPU multiply + lane reduction instead of an
    # MXU matmul with a single live output column.
    o = jnp.sum(h * w2_ref[...], axis=-1, keepdims=True)   # [TILE_B, 1] f32
    o_ref[...] = o + b2_ref[0]                              # SMEM scalar bias


def _round_up(n, m):
    return ((n + m - 1) // m) * m


def _vmem_budget_bytes():
    """Per-core scoped VMEM target with headroom, per generation."""
    try:
        vmem_phys = pltpu.get_tpu_info().vmem_capacity_bytes
    except Exception:
        vmem_phys = 64 * 1024 * 1024  # conservative: v7x per-TC physical
    # v5e/v6e: 128 MiB phys -> 64 MiB scoped; v7x: 64 MiB phys -> 32 MiB scoped.
    return min(vmem_phys // 2, 64 * 1024 * 1024)


def _auto_tile_b(B, S):
    """Pick the largest batch tile that fits the scoped-VMEM budget."""
    B_pad = _round_up(max(B, 1), 8)
    S_pad = _round_up(S, 128)          # x tile's lane dim is padded in VMEM
    H_pad = _round_up(HIDDEN, 128)
    scoped = _vmem_budget_bytes()

    # Resident operands (constant index_map; spec still allocates 2 buffers):
    # w1 bf16 + (b1, w2) rows.
    resident = 2 * (S_pad * H_pad * 2) + 2 * 2 * (8 * H_pad * 4)
    budget = int(scoped * 0.75) - resident

    # Per-row VMEM cost:
    #   x f32 tile (double-buffered, lanes padded)      : 2 * S_pad * 4
    #   in-kernel bf16 copy of x                        : S_pad * 2
    #   h f32 (pre/post ReLU)                           : 2 * H_pad * 4
    #   (TILE_B, 1) out padded to a lane tile, 2 buffers: 2 * 128 * 4
    per_row = 2 * S_pad * 4 + S_pad * 2 + 2 * H_pad * 4 + 2 * 128 * 4

    tile = max(8, budget // per_row)
    tile = min(tile, 8192, B_pad)
    tile = max(8, (tile // 8) * 8)

    # Keep >= 2 grid steps when possible so both v7x TensorCores get work,
    # and balance the last (partial) tile.
    num_tiles = max(2, pl.cdiv(B_pad, tile))
    tile = max(8, min(tile, _round_up(pl.cdiv(B_pad, num_tiles), 8)))
    return tile, scoped


def v_forward(x, w1, b1, w2, b2, *, tile_b=None):
    """x: [B, S] f32; w1: [S, 128]; b1: [128]; w2: [128, 1]; b2: [1]."""
    B, S = x.shape
    H = w1.shape[1]

    if tile_b is None:
        TILE_B, vmem_limit = _auto_tile_b(B, S)
    else:
        TILE_B = max(8, min(_round_up(tile_b, 8), _round_up(B, 8)))
        vmem_limit = _vmem_budget_bytes()

    grid = (pl.cdiv(B, TILE_B),)

    # x stays f32 (cast happens in-kernel). Only the tiny resident w1 is cast
    # in the wrapper (it is read from HBM exactly once).
    x_f32 = x.astype(jnp.float32)
    w1_bf16 = w1.astype(jnp.bfloat16)
    b1_2d = b1.reshape(1, H).astype(jnp.float32)
    w2_row = w2.reshape(1, H).astype(jnp.float32)   # layer-2 weights as a lane row
    b2_s = b2.reshape(1).astype(jnp.float32)        # SMEM scalar

    cost = pl.CostEstimate(
        flops=2 * B * S * H + 2 * B * H,
        transcendentals=0,
        bytes_accessed=B * S * 4 + B * 4 + S * H * 2 + 2 * H * 4 + 4,
    )

    # NOTE: when B % TILE_B != 0, the last tile reads out-of-bounds x rows from
    # the padded block; the corresponding output rows are masked on writeback,
    # so valid rows are unaffected. This is intentional -- do not "fix" it with
    # an in-kernel mask.
    return pl.pallas_call(
        v_mlp_kernel,
        out_shape=jax.ShapeDtypeStruct((B, 1), jnp.float32),
        grid_spec=pltpu.PrefetchScalarGridSpec(
            num_scalar_prefetch=0,
            grid=grid,
            in_specs=[
                pl.BlockSpec((TILE_B, S), lambda i: (i, 0)),   # x streams per tile
                pl.BlockSpec((S, H), lambda i: (0, 0)),        # w1 resident
                pl.BlockSpec((1, H), lambda i: (0, 0)),        # b1 resident
                pl.BlockSpec((1, H), lambda i: (0, 0)),        # w2 row resident
                pl.BlockSpec(memory_space=pltpu.MemorySpace.SMEM),  # b2 scalar
            ],
            out_specs=pl.BlockSpec((TILE_B, 1), lambda i: (i, 0)),
        ),
        compiler_params=pltpu.CompilerParams(
            dimension_semantics=("parallel",),
            vmem_limit_bytes=int(vmem_limit),
        ),
        cost_estimate=cost,
    )(x_f32, w1_bf16, b1_2d, w2_row, b2_s)

    # TODO(synk): if post-fix profiles show the (TILE_B, 1) masked column stores
    # as exposed time, switch to a lane-dense (num_tiles, TILE_B) out_shape
    # (transpose the per-tile result to a [1, TILE_B] row) and reshape/slice in
    # the wrapper; second-order here since output bytes are ~1/S of input bytes.


def init_params(key, state_size, hidden=HIDDEN):
    """Deterministic init mirroring torch.nn.Linear default (uniform +/- 1/sqrt(fan_in))."""
    k1, k2, k3, k4 = jax.random.split(key, 4)
    bound1 = 1.0 / jnp.sqrt(state_size)
    bound2 = 1.0 / jnp.sqrt(hidden)
    # Stored as [in, out] (transposed vs. PyTorch's [out, in]).
    w1 = jax.random.uniform(k1, (state_size, hidden), jnp.float32, -bound1, bound1)
    b1 = jax.random.uniform(k2, (hidden,), jnp.float32, -bound1, bound1)
    w2 = jax.random.uniform(k3, (hidden, 1), jnp.float32, -bound2, bound2)
    b2 = jax.random.uniform(k4, (1,), jnp.float32, -bound2, bound2)
    return w1, b1, w2, b2


def _ref(x, w1, b1, w2, b2):
    # Plain-JAX reference (f32), same math as the PyTorch forward.
    return jnp.maximum(x @ w1 + b1, 0.0) @ w2 + b2


if __name__ == "__main__":
    key = jax.random.PRNGKey(0)
    kx, kp, kx2, kx3 = jax.random.split(key, 4)

    # Small demo shape consistent with the module.
    batch, state_size = 8, 32
    x = jax.random.normal(kx, (batch, state_size), jnp.float32)
    w1, b1, w2, b2 = init_params(kp, state_size)

    out = v_forward(x, w1, b1, w2, b2)
    out = jax.block_until_ready(out)
    assert out.shape == (batch, 1)
    # bf16 layer-1 matmul -> loosened tolerance vs. the f32 reference.
    assert jnp.allclose(out, _ref(x, w1, b1, w2, b2), atol=3e-2, rtol=3e-2)

    # Exercise multi-step batch tiling + a partial last tile (explicit tile_b).
    batch2 = 200
    x2 = jax.random.normal(kx2, (batch2, state_size), jnp.float32)
    out2 = v_forward(x2, w1, b1, w2, b2, tile_b=128)
    out2 = jax.block_until_ready(out2)
    assert out2.shape == (batch2, 1)
    assert jnp.allclose(out2, _ref(x2, w1, b1, w2, b2), atol=3e-2, rtol=3e-2)

    # Exercise the auto-scaled tile path (>= 2 grid steps).
    batch3 = 1024
    x3 = jax.random.normal(kx3, (batch3, state_size), jnp.float32)
    out3 = v_forward(x3, w1, b1, w2, b2)
    out3 = jax.block_until_ready(out3)
    assert out3.shape == (batch3, 1)
    assert jnp.allclose(out3, _ref(x3, w1, b1, w2, b2), atol=3e-2, rtol=3e-2)

    print("KERNEL_OK")
</pallas_src>

<mosaic_0001>
module attributes {stable_mosaic.version = 11 : i64} {
  func.func @v_mlp_kernel(%arg0: i32, %arg1: memref<8x32xf32, #tpu.memory_space<vmem>>, %arg2: memref<32x128xbf16, #tpu.memory_space<vmem>>, %arg3: memref<1x128xf32, #tpu.memory_space<vmem>>, %arg4: memref<1x128xf32, #tpu.memory_space<vmem>>, %arg5: memref<1xf32, #tpu.memory_space<smem>>, %arg6: memref<8x1xf32, #tpu.memory_space<vmem>>) attributes {dimension_semantics = [#tpu.dimension_semantics<parallel>], iteration_bounds = array<i64: 1>, scalar_prefetch = 0 : i64, scratch_operands = 0 : i64, tpu.core_type = #tpu.core_type<tc>, window_params = [{transform_indices = @transform_0, window_bounds = array<i64: 8, 32>}, {pipeline_mode = #tpu.pipeline_mode<synchronous>, transform_indices = @transform_1, window_bounds = array<i64: 32, 128>}, {pipeline_mode = #tpu.pipeline_mode<synchronous>, transform_indices = @transform_2, window_bounds = array<i64: 1, 128>}, {pipeline_mode = #tpu.pipeline_mode<synchronous>, transform_indices = @transform_3, window_bounds = array<i64: 1, 128>}, {transform_indices = @transform_4, window_bounds = array<i64: 1>}, {transform_indices = @transform_5, window_bounds = array<i64: 8, 1>}]} {
    %c0 = arith.constant 0 : index
    %c0_0 = arith.constant 0 : index
    %0 = vector.load %arg1[%c0, %c0_0] : memref<8x32xf32, #tpu.memory_space<vmem>>, vector<8x32xf32>
    %1 = arith.truncf %0 : vector<8x32xf32> to vector<8x32xbf16>
    %c0_1 = arith.constant 0 : index
    %c0_2 = arith.constant 0 : index
    %2 = vector.load %arg2[%c0_1, %c0_2] : memref<32x128xbf16, #tpu.memory_space<vmem>>, vector<32x128xbf16>
    %cst = arith.constant dense<0.000000e+00> : vector<8x128xf32>
    %3 = tpu.matmul %1, %2, %cst {dimension_numbers = #tpu.dot_dimension_numbers<[1], [0], [0], [1], [0, 0, 1, 1], [], []>} : vector<8x32xbf16>, vector<32x128xbf16>, vector<8x128xf32> -> vector<8x128xf32>
    %c0_3 = arith.constant 0 : index
    %c0_4 = arith.constant 0 : index
    %4 = vector.load %arg3[%c0_3, %c0_4] : memref<1x128xf32, #tpu.memory_space<vmem>>, vector<1x128xf32>
    %5 = vector.broadcast %4 : vector<1x128xf32> to vector<8x128xf32>
    %6 = arith.addf %3, %5 : vector<8x128xf32>
    %cst_5 = arith.constant 0.000000e+00 : f32
    %7 = vector.broadcast %cst_5 : f32 to vector<8x128xf32>
    %8 = arith.maximumf %6, %7 : vector<8x128xf32>
    %c0_6 = arith.constant 0 : index
    %c0_7 = arith.constant 0 : index
    %9 = vector.load %arg4[%c0_6, %c0_7] : memref<1x128xf32, #tpu.memory_space<vmem>>, vector<1x128xf32>
    %10 = vector.broadcast %9 : vector<1x128xf32> to vector<8x128xf32>
    %11 = arith.mulf %8, %10 : vector<8x128xf32>
    %cst_8 = arith.constant dense<0.000000e+00> : vector<8xf32>
    %12 = vector.multi_reduction <add>, %11, %cst_8 [1] : vector<8x128xf32> to vector<8xf32>
    %13 = vector.shape_cast %12 : vector<8xf32> to vector<8x1xf32>
    %c0_9 = arith.constant 0 : index
    %14 = memref.load %arg5[%c0_9] : memref<1xf32, #tpu.memory_space<smem>>
    %15 = vector.broadcast %14 : f32 to vector<8x1xf32>
    %16 = arith.addf %13, %15 : vector<8x1xf32>
    %c0_10 = arith.constant 0 : index
    %c0_11 = arith.constant 0 : index
    %17 = vector.load %arg6[%c0_10, %c0_11] : memref<8x1xf32, #tpu.memory_space<vmem>>, vector<8x1xf32>
    tpu.vector_store %arg6[%c0_10, %c0_11], %16 {strides = array<i32>} : memref<8x1xf32, #tpu.memory_space<vmem>>, vector<8x1xf32>,
    return
  }
  func.func @transform_0(%arg0: i32) -> (i32, i32) {
    %c0_i32 = arith.constant 0 : i32
    %c0_i32_0 = arith.constant 0 : i32
    return %arg0, %c0_i32 : i32, i32
  }
  func.func @transform_1(%arg0: i32) -> (i32, i32) {
    %c0_i32 = arith.constant 0 : i32
    %c0_i32_0 = arith.constant 0 : i32
    %c0_i32_1 = arith.constant 0 : i32
    return %c0_i32, %c0_i32_0 : i32, i32
  }
  func.func @transform_2(%arg0: i32) -> (i32, i32) {
    %c0_i32 = arith.constant 0 : i32
    %c0_i32_0 = arith.constant 0 : i32
    %c0_i32_1 = arith.constant 0 : i32
    return %c0_i32, %c0_i32_0 : i32, i32
  }
  func.func @transform_3(%arg0: i32) -> (i32, i32) {
    %c0_i32 = arith.constant 0 : i32
    %c0_i32_0 = arith.constant 0 : i32
    %c0_i32_1 = arith.constant 0 : i32
    return %c0_i32, %c0_i32_0 : i32, i32
  }
  func.func @transform_4(%arg0: i32) -> i32 {
    %c0_i32 = arith.constant 0 : i32
    %c0_i32_0 = arith.constant 0 : i32
    return %c0_i32 : i32
  }
  func.func @transform_5(%arg0: i32) -> (i32, i32) {
    %c0_i32 = arith.constant 0 : i32
    %c0_i32_0 = arith.constant 0 : i32
    return %arg0, %c0_i32 : i32, i32
  }
}

</mosaic_0001>

<llo_original>
// kernel: tpu_custom_call.1
$region0: #{tpu_custom_call.1}
  #allocation0 [shape = 'u32[]', space=smem, size = 0x4, offset = 0x4, fixed_abs, tag = 'smem constant byte address 0x4 - core index']
  #allocation1 [shape = 'u32[72,128]{1,0:T(1,128)}', space=vmem, size = 0x9000, scoped, tag = 'internal scratch']
  #allocation2 [shape = 'f32[1]{0:T(128)S(6)}', space=smem, size = 0x200, scoped, tag = 'scoped memory for tpu_custom_call.1']
  %s0 = inlined_call_operand.hbm [shape: f32[8,32], index: 0, kind: input, shape index: {}]
  %s1 = inlined_call_operand.hbm [shape: bf16[32,128], index: 1, kind: input, shape index: {}]
  %s2 = inlined_call_operand.vmem [shape: f32[1,128], index: 2, kind: input, shape index: {}]
  %s3 = inlined_call_operand.vmem [shape: f32[1,128], index: 3, kind: input, shape index: {}]
  %s4 = inlined_call_operand.<no memory space> [shape: f32[1], index: 4, kind: input, shape index: {}]
  %s5 = inlined_call_operand.vmem [shape: f32[8,1], index: 5, kind: output, shape index: {}]
  %s6 = sld [smem:[#allocation0]]
  $region38: #{tpu_custom_call.1} parent=0
    _
  %s8 = ssub.s32 1, %s6
  %s9 = scalar_select 0, %s8, %s6
  %10 = sst [smem:[#allocation2]] %s4
  $region1: #{tpu_custom_call.1} parent=0
    #allocation3 [shape = 'u8[4096]{0}', space=vmem, size = 0x1000, scoped, tag = 'input window, operand 0, single buffered']
    #allocation4 [shape = 's32[1]{0}', space=sflag, size = 0x4, scoped, tag = 'scoped memory for tpu_custom_call.1']
    #allocation5 [shape = 'u8[8192]{0}', space=vmem, size = 0x2000, scoped, tag = 'input window, operand 1, single buffered']
    #allocation6 [shape = 's32[1]{0}', space=sflag, size = 0x4, scoped, tag = 'scoped memory for tpu_custom_call.1']
    %11 = vsyncpa [#allocation4], 0
    %12 = vsyncpa [#allocation6], 0
    // Predicated region
    $region2: #{tpu_custom_call.1} parent=1 // pred_check
      _
    $region3: #{tpu_custom_call.1} parent=1 // pred_check_branch
      %14 = sbr.rel (0) target = $region5
    $region4: #{tpu_custom_call.1} parent=1 // pred_region
      %16 = vsyncadd [#allocation4], 0
      %s18 = sshll.u32 %s0, 4
      %s19 = int_to_ptr.hbm [resolvable:$true] %s18
      %s20 = sshll.u32 [#allocation3], 4
      %s21 = int_to_ptr.vmem [resolvable:$true] %s20
      %23 = dma.hbm_to_vmem [thread:$0]  %s19, 128, %s21, [#allocation4]
    $region5: #{tpu_custom_call.1} parent=1 // pred_fallthru
      _
    // Predicated region
    $region6: #{tpu_custom_call.1} parent=1 // pred_check
      _
    $region7: #{tpu_custom_call.1} parent=1 // pred_check_branch
      %25 = sbr.rel (0) target = $region9
    $region8: #{tpu_custom_call.1} parent=1 // pred_region
      %27 = vsyncadd [#allocation6], 0
      %s28 = sshll.u32 %s1, 4
      %s29 = int_to_ptr.hbm [resolvable:$true] %s28
      %s30 = sshll.u32 [#allocation5], 4
      %s31 = int_to_ptr.vmem [resolvable:$true] %s30
      %36 = dma.hbm_to_vmem [thread:$0]  %s29, 256, %s31, [#allocation6], 64, 64, 4
    $region9: #{tpu_custom_call.1} parent=1 // pred_fallthru
      _
    // Predicated region
    $region10: #{tpu_custom_call.1} parent=1 // pred_check
      _
    $region11: #{tpu_custom_call.1} parent=1 // pred_check_branch
      %38 = sbr.rel (0) target = $region13
    $region12: #{tpu_custom_call.1} parent=1 // pred_region
      _
    $region13: #{tpu_custom_call.1} parent=1 // pred_fallthru
      _
    // Predicated region
    $region14: #{tpu_custom_call.1} parent=1 // pred_check
      _
    $region15: #{tpu_custom_call.1} parent=1 // pred_check_branch
      %40 = sbr.rel (0) target = $region17
    $region16: #{tpu_custom_call.1} parent=1 // pred_region
      _
    $region17: #{tpu_custom_call.1} parent=1 // pred_fallthru
      _
    // Predicated region
    $region18: #{tpu_custom_call.1} parent=1 // pred_check
      _
    $region19: #{tpu_custom_call.1} parent=1 // pred_check_branch
      %42 = sbr.rel (0) target = $region21
    $region20: #{tpu_custom_call.1} parent=1 // pred_region
      _
    $region21: #{tpu_custom_call.1} parent=1 // pred_fallthru
      _
    // Predicated region
    $region22: #{tpu_custom_call.1} parent=1 // pred_check
      _
    $region23: #{tpu_custom_call.1} parent=1 // pred_check_branch
      %44 = sbr.rel (0) target = $region25
    $region24: #{tpu_custom_call.1} parent=1 // pred_region
      %46 = dma.done [#allocation4], 128
    $region25: #{tpu_custom_call.1} parent=1 // pred_fallthru
      _
    // Predicated region
    $region26: #{tpu_custom_call.1} parent=1 // pred_check
      _
    $region27: #{tpu_custom_call.1} parent=1 // pred_check_branch
      %48 = sbr.rel (0) target = $region29
    $region28: #{tpu_custom_call.1} parent=1 // pred_region
      %50 = dma.done [#allocation6], 256
    $region29: #{tpu_custom_call.1} parent=1 // pred_fallthru
      _
    %v52 = vld [vmem:[#allocation3] sm:$0xff]
    %v53 = vpack.c.bf16 %v52, %v52
    %v54 = vld [vmem:[#allocation5] sm:$0xf]
    %v55 = vld [vmem:[#allocation5 + $0x4] sm:$0xf]
    %v56 = vld [vmem:[#allocation5 + $0x8] sm:$0xf]
    %v57 = vld [vmem:[#allocation5 + $0xc] sm:$0xf]
    %v58 = vld [vmem:[%s2] sm:$0x1]
    %v60 = vperm.slane %v58, 0
    %v66 = vunpack.c.l.b16 %v54
    %v67 = vunpack.c.l.b16 %v55
    %v68 = vunpack.c.l.b16 %v56
    %v69 = vunpack.c.l.b16 %v57
    %v70 = vpack.c.b16 %v67, %v66
    %v71 = vpack.c.b16 %v69, %v68
    %vm74 = vcmask 261120
    %v76 = vsel %vm74, %v53, 0
    %78 = vmatpush.bf16.msra.mxu0 0
    %79 = vmatpush.bf16.msra.mxu0 0
    %80 = vmatpush.bf16.msra.mxu0 0
    %81 = vmatpush.bf16.msra.mxu0 0
    %82 = vmatpush.bf16.msra.mxu0 0
    %83 = vmatpush.bf16.msra.mxu0 0
    %84 = vmatpush.bf16.msra.mxu0 %v71
    %85 = vmatpush.bf16.msra.mxu0 %v70
    %86 = vmatmul.bf16.gmra.mxu0 %v76
    %v87 = vpop.f32.mrf.mxu0
    %v88 = vadd.f32 %v60, %v87
    %v89 = vpop.f32.mrf.mxu0
    %90 = vdwg.mxu0
    %v91 = vmax.f32 %v88, 0.0
    %v92 = vld [vmem:[%s3] sm:$0x1]
    %v94 = vperm.slane %v92, 0
    %v96 = vmul.f32 %v91, %v94
    %97 = vadd.xlane.f32.xlu0 %v96
    %v98 = vpop.xlane.xlu0 %97
    %s99 = sld [smem:[#allocation2]]
    %v100 = vstv %s99
    %v101 = vadd.f32 %v98, %v100
    %vm102 = vcmask 7168
    %103 = vst.msk [vmem:[%s5] sm:$0xff] %vm102, %v101
    // Predicated region
    $region30: #{tpu_custom_call.1} parent=1 // pred_check
      _
    $region31: #{tpu_custom_call.1} parent=1 // pred_check_branch
      %105 = sbr.rel (0) target = $region33
    $region32: #{tpu_custom_call.1} parent=1 // pred_region
      _
    $region33: #{tpu_custom_call.1} parent=1 // pred_fallthru
      _
    // Predicated region
    $region34: #{tpu_custom_call.1} parent=1 // pred_check
      _
    $region35: #{tpu_custom_call.1} parent=1 // pred_check_branch
      %107 = sbr.rel (0) target = $region37
    $region36: #{tpu_custom_call.1} parent=1 // pred_region
      _
    $region37: #{tpu_custom_call.1} parent=1 // pred_fallthru
      _
    %108 = vsyncpa [#allocation4], 1
    %109 = vsyncpa [#allocation6], 1

</llo_original>
